<compile_context>
chip_gen: v6e
topology: v6e:2x2x1
jax: 0.10.0
libtpu: 0.0.40
codegen_flags: <defaults>
</compile_context>

<pallas_src>
import jax
import jax.numpy as jnp
from jax.experimental import pallas as pl
from jax.experimental.pallas import tpu as pltpu

LANES = 128
MAX_BLOCK_ROWS = 1024      # 1024 x 128 f32 = 512 KiB tile (1 MiB double-buffered)


def _elementwise_loss(x, gan_type, target_is_real, is_disc,
                      real_label_val, fake_label_val):
    """Per-element loss term; mean + weighting happen outside."""
    if gan_type == 'vanilla':
        # BCEWithLogitsLoss vs constant target t: max(x,0) - x*t + log1p(exp(-|x|))
        t = real_label_val if target_is_real else fake_label_val
        return jnp.maximum(x, 0.0) - x * t + jnp.log1p(jnp.exp(-jnp.abs(x)))
    if gan_type == 'lsgan':
        # MSE vs constant target t
        t = real_label_val if target_is_real else fake_label_val
        d = x - t
        return d * d
    if gan_type == 'wgan':
        return -x if target_is_real else x
    if gan_type == 'wgan_softplus':
        z = -x if target_is_real else x
        return jnp.maximum(z, 0.0) + jnp.log1p(jnp.exp(-jnp.abs(z)))
    if gan_type == 'hinge':
        if is_disc:
            z = -x if target_is_real else x
            return jnp.maximum(1.0 + z, 0.0)
        return -x
    raise NotImplementedError(f'GAN type {gan_type} is not implemented.')


def _make_kernel(gan_type, target_is_real, is_disc, real_label_val,
                 fake_label_val, block_rows, tiles_per_core, n_full_tiles,
                 full_rows, rem_lanes, needs_mask):
    sub_groups = block_rows // 8

    def _fold(f):
        # (block_rows, 128) -> (1, 8, 128): layout-preserving reshape + vreg adds.
        return f.reshape(sub_groups, 8, LANES).sum(axis=0).reshape(1, 8, LANES)

    def kernel(x_ref, o_ref):
        c = pl.program_id(0)        # per-core chunk ("parallel")
        i = pl.program_id(1)        # tile within chunk ("arbitrary")

        @pl.when(i == 0)
        def _init():
            o_ref[...] = jnp.zeros_like(o_ref)

        x = x_ref[...].astype(jnp.float32)
        f = _elementwise_loss(x, gan_type, target_is_real, is_disc,
                              real_label_val, fake_label_val)

        if not needs_mask:
            # Every tile in the grid is fully covered by valid data.
            o_ref[...] += _fold(f)
        else:
            g = c * tiles_per_core + i          # global tile index

            @pl.when(g < n_full_tiles)
            def _full_tile():
                o_ref[...] += _fold(f)

            @pl.when(g >= n_full_tiles)
            def _ragged_tile():
                row = jax.lax.broadcasted_iota(jnp.int32, f.shape, 0)
                lane = jax.lax.broadcasted_iota(jnp.int32, f.shape, 1)
                grow = g * block_rows + row     # global row index (int32-safe)
                mask = (grow < full_rows) | ((grow == full_rows) &
                                             (lane < rem_lanes))
                o_ref[...] += _fold(jnp.where(mask, f, 0.0))

    return kernel


def gan_loss(x, gan_type, target_is_real, is_disc=False,
             real_label_val=1.0, fake_label_val=0.0, loss_weight=1.0,
             num_cores=2):
    """Pallas implementation of GANLoss.forward(input, target_is_real, is_disc)."""
    n = x.size
    # loss_weight only applies to generators (is_disc=False), as in the module.
    weight = 1.0 if is_disc else float(loss_weight)

    # ---- layout: lane-dense [rows, 128] slab, native dtype, minimal padding ----
    rows_raw = pl.cdiv(n, LANES)
    block_rows = min(MAX_BLOCK_ROWS, rows_raw)
    block_rows = max(8, ((block_rows + 7) // 8) * 8)
    rows = max(rows_raw, block_rows)            # only tiny inputs pad extra rows
    padded = rows * LANES

    x_flat = x.reshape(-1)
    if padded != n:
        x_flat = jnp.pad(x_flat, (0, padded - n))   # tail-only pad; skipped if aligned
    x2d = x_flat.reshape(rows, LANES)

    t_total = pl.cdiv(rows, block_rows)
    num_cores_eff = max(1, min(int(num_cores), t_total))
    tiles_per_core = pl.cdiv(t_total, num_cores_eff)
    t_grid = num_cores_eff * tiles_per_core

    tile_elems = block_rows * LANES
    n_full_tiles = n // tile_elems              # tiles fully covered by valid data
    needs_mask = n_full_tiles < t_grid
    full_rows = n // LANES
    rem_lanes = n % LANES

    kernel = _make_kernel(gan_type, bool(target_is_real), bool(is_disc),
                          float(real_label_val), float(fake_label_val),
                          block_rows, tiles_per_core, n_full_tiles,
                          full_rows, rem_lanes, needs_mask)

    # Clamp the block index so no DMA ever goes fully out of bounds; clamped
    # duplicate tiles are fully masked to zero inside the kernel.
    in_map = lambda c, i: (jnp.minimum(c * tiles_per_core + i, t_total - 1), 0)

    partials = pl.pallas_call(
        kernel,
        out_shape=jax.ShapeDtypeStruct((num_cores_eff, 8, LANES), jnp.float32),
        grid_spec=pltpu.PrefetchScalarGridSpec(
            num_scalar_prefetch=0,
            grid=(num_cores_eff, tiles_per_core),
            in_specs=[pl.BlockSpec((block_rows, LANES), in_map)],
            out_specs=pl.BlockSpec((1, 8, LANES), lambda c, i: (c, 0, 0)),
        ),
        compiler_params=pltpu.CompilerParams(
            dimension_semantics=("parallel", "arbitrary")),
    )(x2d)

    # Tiny final reduce (num_cores*8*128 floats) + mean / weight scaling.
    return jnp.sum(partials) * (weight / float(n))


# -------- pure-JAX reference (mirrors the PyTorch module exactly) --------
def gan_loss_ref(x, gan_type, target_is_real, is_disc=False,
                 real_label_val=1.0, fake_label_val=0.0, loss_weight=1.0):
    x = x.astype(jnp.float32)
    if gan_type == 'vanilla':
        t = real_label_val if target_is_real else fake_label_val
        loss = jnp.mean(jnp.maximum(x, 0.0) - x * t
                        + jnp.log1p(jnp.exp(-jnp.abs(x))))
    elif gan_type == 'lsgan':
        t = real_label_val if target_is_real else fake_label_val
        loss = jnp.mean((x - t) ** 2)
    elif gan_type == 'wgan':
        loss = -jnp.mean(x) if target_is_real else jnp.mean(x)
    elif gan_type == 'wgan_softplus':
        z = -x if target_is_real else x
        loss = jnp.mean(jax.nn.softplus(z))
    elif gan_type == 'hinge':
        if is_disc:
            z = -x if target_is_real else x
            loss = jnp.mean(jax.nn.relu(1.0 + z))
        else:
            loss = -jnp.mean(x)
    else:
        raise NotImplementedError
    return loss if is_disc else loss * loss_weight


if __name__ == "__main__":
    key = jax.random.PRNGKey(0)
    k1, k2, k3 = jax.random.split(key, 3)

    # Primary NCHW-like discriminator prediction (small, lane-aligned).
    x_main = jax.random.normal(k1, (2, 4, 16, 16), dtype=jnp.float32)
    # Ragged size (exercises lane padding + tail masking).
    x_ragged = jax.random.normal(k2, (2, 3, 7, 9), dtype=jnp.float32)
    # Larger bf16 input (exercises native-dtype DMA, multi-tile accumulation and
    # the dual-core grid split with a clamped duplicate tile).
    x_bf16 = jax.random.normal(k3, (4, 8, 96, 96),
                               dtype=jnp.float32).astype(jnp.bfloat16)

    ok = True

    def check(x, gt, tir, disc):
        global ok
        got = jax.block_until_ready(
            gan_loss(x, gt, tir, is_disc=disc, loss_weight=0.5))
        want = gan_loss_ref(x, gt, tir, is_disc=disc, loss_weight=0.5)
        if not jnp.allclose(got, want, rtol=2e-5, atol=2e-5):
            ok = False
            print(f"MISMATCH shape={tuple(x.shape)} dtype={x.dtype} "
                  f"{gt} real={tir} disc={disc}: {got} vs {want}")

    # Full config sweep on the primary shape.
    for gt in ['vanilla', 'lsgan', 'wgan', 'wgan_softplus', 'hinge']:
        for tir in (True, False):
            for disc in (True, False):
                check(x_main, gt, tir, disc)

    # Spot checks on the other layouts / dtypes.
    spot = [('vanilla', True, True), ('lsgan', False, False),
            ('wgan_softplus', True, False), ('hinge', False, True)]
    for gt, tir, disc in spot:
        check(x_ragged, gt, tir, disc)
        check(x_bf16, gt, tir, disc)

    if ok:
        print("KERNEL_OK")
</pallas_src>

<mosaic_0001>
module attributes {stable_mosaic.version = 11 : i64} {
  func.func @kernel(%arg0: i32, %arg1: i32, %arg2: memref<16x128xf32, #tpu.memory_space<vmem>>, %arg3: memref<1x8x128xf32, #tpu.memory_space<vmem>>) attributes {dimension_semantics = [#tpu.dimension_semantics<parallel>, #tpu.dimension_semantics<arbitrary>], iteration_bounds = array<i64: 1, 1>, scalar_prefetch = 0 : i64, scratch_operands = 0 : i64, tpu.core_type = #tpu.core_type<tc>, window_params = [{transform_indices = @transform_0, window_bounds = array<i64: 16, 128>}, {transform_indices = @transform_1, window_bounds = array<i64: 1, 8, 128>}]} {
    %c0_i32 = arith.constant 0 : i32
    %0 = arith.cmpi eq, %arg1, %c0_i32 : i32
    %1 = arith.extui %0 : i1 to i32
    %c0_i32_0 = arith.constant 0 : i32
    %2 = arith.cmpi ne, %1, %c0_i32_0 : i32
    scf.if %2 {
      %cst_11 = arith.constant 0.000000e+00 : f32
      %21 = vector.broadcast %cst_11 : f32 to vector<1x8x128xf32>
      %c0_12 = arith.constant 0 : index
      %c0_13 = arith.constant 0 : index
      %c0_14 = arith.constant 0 : index
      %22 = vector.load %arg3[%c0_12, %c0_13, %c0_14] : memref<1x8x128xf32, #tpu.memory_space<vmem>>, vector<1x8x128xf32>
      tpu.vector_store %arg3[%c0_12, %c0_13, %c0_14], %21 {strides = array<i32>} : memref<1x8x128xf32, #tpu.memory_space<vmem>>, vector<1x8x128xf32>,
    } else {
    }
    %c0 = arith.constant 0 : index
    %c0_1 = arith.constant 0 : index
    %3 = vector.load %arg2[%c0, %c0_1] : memref<16x128xf32, #tpu.memory_space<vmem>>, vector<16x128xf32>
    %cst = arith.constant 0.000000e+00 : f32
    %4 = vector.broadcast %cst : f32 to vector<16x128xf32>
    %5 = arith.maximumf %3, %4 : vector<16x128xf32>
    %cst_2 = arith.constant 1.000000e+00 : f32
    %6 = vector.broadcast %cst_2 : f32 to vector<16x128xf32>
    %7 = arith.mulf %3, %6 : vector<16x128xf32>
    %8 = arith.subf %5, %7 : vector<16x128xf32>
    %9 = math.absf %3 : vector<16x128xf32>
    %cst_3 = arith.constant 0.000000e+00 : f32
    %10 = vector.broadcast %cst_3 : f32 to vector<16x128xf32>
    %11 = arith.subf %10, %9 : vector<16x128xf32>
    %12 = math.exp %11 : vector<16x128xf32>
    %13 = math.log1p %12 : vector<16x128xf32>
    %14 = arith.addf %8, %13 : vector<16x128xf32>
    %c0_4 = arith.constant 0 : index
    %c0_5 = arith.constant 0 : index
    %c0_6 = arith.constant 0 : index
    %15 = vector.load %arg3[%c0_4, %c0_5, %c0_6] : memref<1x8x128xf32, #tpu.memory_space<vmem>>, vector<1x8x128xf32>
    %16 = vector.shape_cast %14 : vector<16x128xf32> to vector<2x8x128xf32>
    %cst_7 = arith.constant dense<0.000000e+00> : vector<8x128xf32>
    %17 = vector.multi_reduction <add>, %16, %cst_7 [0] : vector<2x8x128xf32> to vector<8x128xf32>
    %18 = vector.shape_cast %17 : vector<8x128xf32> to vector<1x8x128xf32>
    %19 = arith.addf %15, %18 : vector<1x8x128xf32>
    %c0_8 = arith.constant 0 : index
    %c0_9 = arith.constant 0 : index
    %c0_10 = arith.constant 0 : index
    %20 = vector.load %arg3[%c0_8, %c0_9, %c0_10] : memref<1x8x128xf32, #tpu.memory_space<vmem>>, vector<1x8x128xf32>
    tpu.vector_store %arg3[%c0_8, %c0_9, %c0_10], %19 {strides = array<i32>} : memref<1x8x128xf32, #tpu.memory_space<vmem>>, vector<1x8x128xf32>,
    return
  }
  func.func @transform_0(%arg0: i32, %arg1: i32) -> (i32, i32) {
    %c1_i32 = arith.constant 1 : i32
    %0 = arith.muli %arg0, %c1_i32 : i32
    %1 = arith.addi %0, %arg1 : i32
    %c0_i32 = arith.constant 0 : i32
    %2 = arith.minsi %1, %c0_i32 : i32
    %c0_i32_0 = arith.constant 0 : i32
    %c0_i32_1 = arith.constant 0 : i32
    return %2, %c0_i32_0 : i32, i32
  }
  func.func @transform_1(%arg0: i32, %arg1: i32) -> (i32, i32, i32) {
    %c0_i32 = arith.constant 0 : i32
    %c0_i32_0 = arith.constant 0 : i32
    %c0_i32_1 = arith.constant 0 : i32
    return %arg0, %c0_i32, %c0_i32_0 : i32, i32, i32
  }
}

</mosaic_0001>

<llo_original>
// kernel: tpu_custom_call.1
$region0: #{tpu_custom_call.1}
  #allocation0 [shape = 'u32[]', space=smem, size = 0x4, offset = 0x4, fixed_abs, tag = 'smem constant byte address 0x4 - core index']
  #allocation1 [shape = 'u32[144,128]{1,0:T(1,128)}', space=vmem, size = 0x12000, scoped, tag = 'internal scratch']
  %s0 = inlined_call_operand.hbm [shape: f32[16,128], index: 0, kind: input, shape index: {}]
  %s1 = inlined_call_operand.hbm [shape: f32[1,8,128], index: 1, kind: output, shape index: {}]
  %s2 = sld [smem:[#allocation0]]
  $region22: #{tpu_custom_call.1} parent=0
    _
  %s4 = ssub.s32 1, %s2
  %s5 = scalar_select 0, %s4, %s2
  $region1: #{tpu_custom_call.1} parent=0
    #allocation2 [shape = 'u8[8192]{0}', space=vmem, size = 0x2000, scoped, tag = 'input window, operand 0, single buffered']
    #allocation3 [shape = 's32[1]{0}', space=sflag, size = 0x4, scoped, tag = 'scoped memory for tpu_custom_call.1']
    #allocation4 [shape = 's32[1]{0}', space=sflag, size = 0x4, scoped, tag = 'scoped memory for tpu_custom_call.1']
    #allocation5 [shape = 'u8[4096]{0}', space=vmem, size = 0x1000, scoped, tag = 'output window, operand 0, single buffered']
    %6 = vsyncpa [#allocation3], 0
    %7 = vsyncpa [#allocation4], 0
    // Predicated region
    $region2: #{tpu_custom_call.1} parent=1 // pred_check
      _
    $region3: #{tpu_custom_call.1} parent=1 // pred_check_branch
      %9 = sbr.rel (0) target = $region5
    $region4: #{tpu_custom_call.1} parent=1 // pred_region
      %s10 = sadd.s32 0, 0
      %p11 = scmp.lt.s32.totalorder %s10, 0
      %s12 = scalar_select %p11, %s10, 0
      %s13 = smul.u32 2, %s12
      %s15 = ssub.s32 256, 256
      %16 = vsyncadd [#allocation3], %s15
      %s17 = smul.addr %s13, 128
      %s18 = scalar_lea.hbm %s0, %s17
      %s19 = sshll.u32 [#allocation2], 4
      %s20 = int_to_ptr.vmem [resolvable:$true] %s19
      %25 = dma.hbm_to_vmem [thread:$0]  %s18, 256, %s20, [#allocation3], 128, 128, 8
    $region5: #{tpu_custom_call.1} parent=1 // pred_fallthru
      _
    // Predicated region
    $region6: #{tpu_custom_call.1} parent=1 // pred_check
      _
    $region7: #{tpu_custom_call.1} parent=1 // pred_check_branch
      %27 = sbr.rel (0) target = $region9
    $region8: #{tpu_custom_call.1} parent=1 // pred_region
      %28 = dma.done [#allocation3], 256
    $region9: #{tpu_custom_call.1} parent=1 // pred_fallthru
      _
    %s29 = sadd.s32 0, 0
    %p30 = scmp.lt.s32.totalorder %s29, 0
    %s31 = scalar_select %p30, %s29, 0
    %s32 = smul.u32 2, %s31
    %p33 = scmp.eq.s32.totalorder 0, 0
    // Predicated region
    $region10: #{tpu_custom_call.1} parent=1 // pred_check
      %p34 = pneg %p33
    $region11: #{tpu_custom_call.1} parent=1 // pred_check_branch
      %36 = sbr.rel (%p34) target = $region13
    $region12: #{tpu_custom_call.1} parent=1 // pred_region
      %37 = vst [vmem:[#allocation5] sm:$0xff] 0.0
    $region13: #{tpu_custom_call.1} parent=1 // pred_fallthru
      _
    %v38 = vld [vmem:[#allocation2] sm:$0xff]
    %v39 = vld [vmem:[#allocation2 + $0x8] sm:$0xff]
    %v40 = vmax.f32 %v38, 0.0
    %v41 = vmax.f32 %v39, 0.0
    %v42 = vsub.f32 %v40, %v38
    %v43 = vsub.f32 %v41, %v39
    %v44 = vand.u32 2147483647, %v38
    %v45 = vand.u32 2147483647, %v39
    %v46 = vsub.f32 0.0, %v44
    %v47 = vsub.f32 0.0, %v45
    %v48 = vmul.f32 %v46, 1.442695
    %v49 = vpow.pop %v48
    %v50 = vmul.f32 %v47, 1.442695
    %v51 = vpow.pop %v50
    %v52 = vadd.f32 %v49, 1.0
    %v53 = vlog2.pop %v52
    %v54 = vmul.f32 %v53, 0.6931472
    %v55 = vmul.f32 -0.5, %v49
    %v56 = vadd.f32 %v55, 1.0
    %v57 = vmul.f32 %v56, %v49
    %v58 = vand.u32 2147483647, %v49
    %vm59 = vcmp.lt.f32.partialorder %v58, 0.0004427343
    %v60 = vsel %vm59, %v57, %v54
    %v61 = vadd.f32 %v51, 1.0
    %v62 = vlog2.pop %v61
    %v63 = vmul.f32 %v62, 0.6931472
    %v64 = vmul.f32 -0.5, %v51
    %v65 = vadd.f32 %v64, 1.0
    %v66 = vmul.f32 %v65, %v51
    %v67 = vand.u32 2147483647, %v51
    %vm68 = vcmp.lt.f32.partialorder %v67, 0.0004427343
    %v69 = vsel %vm68, %v66, %v63
    %v70 = vadd.f32 %v42, %v60
    %v71 = vadd.f32 %v43, %v69
    %v72 = vld [vmem:[#allocation5] sm:$0xff]
    %v73 = vadd.f32 %v70, %v71
    %v74 = vadd.f32 %v72, %v73
    %75 = vst [vmem:[#allocation5] sm:$0xff] %v74
    // Predicated region
    $region14: #{tpu_custom_call.1} parent=1 // pred_check
      _
    $region15: #{tpu_custom_call.1} parent=1 // pred_check_branch
      %77 = sbr.rel (0) target = $region17
    $region16: #{tpu_custom_call.1} parent=1 // pred_region
      %s79 = ssub.s32 128, 128
      %80 = vsyncadd [#allocation4], %s79
      %s82 = sshll.u32 [#allocation5], 4
      %s83 = int_to_ptr.vmem [resolvable:$true] %s82
      %85 = dma.vmem_to_hbm [thread:$0]  %s83, 128, %s1, [#allocation4]
    $region17: #{tpu_custom_call.1} parent=1 // pred_fallthru
      _
    // Predicated region
    $region18: #{tpu_custom_call.1} parent=1 // pred_check
      _
    $region19: #{tpu_custom_call.1} parent=1 // pred_check_branch
      %87 = sbr.rel (0) target = $region21
    $region20: #{tpu_custom_call.1} parent=1 // pred_region
      %88 = dma.done [#allocation4], 128
    $region21: #{tpu_custom_call.1} parent=1 // pred_fallthru
      _
    %89 = vsyncpa [#allocation3], 1
    %90 = vsyncpa [#allocation4], 1

</llo_original>
